<compile_context>
chip_gen: v5e
topology: v5e:2x2
jax: 0.10.0
libtpu: 0.0.40
codegen_flags: <defaults>
</compile_context>

<pallas_src>
import functools

import jax
import jax.numpy as jnp
import numpy as np
from jax import lax
from jax.experimental import pallas as pl
from jax.experimental.pallas import tpu as pltpu


def _round_up(x, m):
    return ((x + m - 1) // m) * m


def _fused_patch_embed_kernel(xw_ref, w_ref, bgb_ref, o_ref, *,
                              patch_size, stride, w_out, m_img, eps):
    """Conv-as-K-matmuls + bias + LayerNorm for ONE image.

    xw_ref : (stride, GH*w_out, K*C)  width-expanded rows, laid out as
             (row phase, row_group*w_out + ow, kw*C + c), MXU dtype
    w_ref  : (K, K*C, hidden)         weight slab per kernel row kh, MXU dtype
    bgb_ref: (3, hidden) float32      rows = [bias, gamma, beta]
    o_ref  : (m_img, hidden)          output tokens, row-major over (oh, ow)
    """
    hidden = o_ref.shape[-1]

    # Accumulate the conv as K matmuls over the (kw, c) contraction (f32 acc).
    acc = None
    for kh in range(patch_size):
        qh, ph = kh // stride, kh % stride
        start = qh * w_out                                  # static offset
        lhs = xw_ref[ph, start:start + m_img, :]            # (m_img, K*C)
        part = jnp.dot(lhs, w_ref[kh], preferred_element_type=jnp.float32)
        acc = part if acc is None else acc + part
    y = acc + bgb_ref[0:1, :]                               # (m_img, hidden) f32

    # LayerNorm over the true (unpadded) hidden axis, single-pass statistics.
    inv_h = 1.0 / float(hidden)
    mean = jnp.sum(y, axis=-1, keepdims=True) * inv_h
    var = jnp.sum(y * y, axis=-1, keepdims=True) * inv_h - mean * mean
    normed = (y - mean) * lax.rsqrt(var + eps)
    o_ref[...] = (normed * bgb_ref[1:2, :] + bgb_ref[2:3, :]).astype(o_ref.dtype)


@functools.partial(jax.jit,
                   static_argnames=("patch_size", "stride", "eps", "mxu_dtype"))
def _forward(x, weight, bias, gamma, beta, *, patch_size, stride, eps,
             mxu_dtype):
    b, c, h, w = x.shape
    hidden = weight.shape[0]
    k, s = patch_size, stride
    pad = k // 2

    h_out = (h + 2 * pad - k) // s + 1
    w_out = (w + 2 * pad - k) // s + 1
    m_img = h_out * w_out
    kc = k * c

    mxu_dt = np.dtype(mxu_dtype) if mxu_dtype is not None else np.dtype(x.dtype)
    out_dt = x.dtype

    # Padded spatial extents: cover the conv receptive field and make the row
    # count a multiple of `stride` so rows split exactly into (group, phase).
    need_h = (h_out - 1) * s + k
    need_w = (w_out - 1) * s + k
    h_p = _round_up(max(need_h, h + pad), s)
    w_p = max(need_w, w + pad)
    gh = h_p // s                                           # row groups

    # Cast to the MXU dtype BEFORE any expansion so the (small) expanded array
    # is materialized and re-read at half width.
    x_m = x.astype(mxu_dt)
    x_pad = jnp.pad(x_m, ((0, 0), (0, 0),
                          (pad, h_p - h - pad), (pad, w_p - w - pad)))

    # Width-only patch expansion (~K/stride growth, not K^2/stride^2).  The
    # kh (row) shifts are resolved inside the kernel.
    cols = [x_pad[:, :, :, kw:kw + s * w_out:s] for kw in range(k)]
    xw = jnp.stack(cols, axis=0)                 # (K, B, C, H_p, w_out)
    xw = jnp.transpose(xw, (1, 3, 4, 0, 2))      # (B, H_p, w_out, K, C)
    xw = xw.reshape(b, gh, s, w_out, kc)         # rows -> (group, phase)
    xw = jnp.transpose(xw, (0, 2, 1, 3, 4))      # (B, s, GH, w_out, K*C)
    xw = xw.reshape(b, s, gh * w_out, kc)        # flatten (group, ow)

    # Weight as per-kh slabs: w_k[kh, kw*C + c, o] = weight[o, c, kh, kw]
    # (matches the (kw, c) order of xw's last axis).
    w_k = jnp.transpose(weight, (2, 3, 1, 0)).reshape(k, kc, hidden).astype(mxu_dt)
    # bias / gamma / beta fused into one small resident f32 operand.
    bgb = jnp.stack([bias, gamma, beta]).astype(jnp.float32)        # (3, hidden)

    # VMEM: per-step footprint (double-buffered pipeline buffers + f32
    # temporaries), capped at 3/4 of physical per-core VMEM (48 MiB on v7x,
    # 96 MiB on v5e/v6e).
    in_b = int(mxu_dt.itemsize)
    est = (2 * s * gh * w_out * kc * in_b                 # xw block (x2 bufs)
           + 2 * k * kc * hidden * in_b                   # weight slabs
           + 2 * 3 * hidden * 4                           # bias/gamma/beta
           + 2 * m_img * hidden * np.dtype(out_dt).itemsize  # output block
           + 6 * m_img * hidden * 4                       # f32 temporaries
           + 2 * m_img * kc * in_b)                       # lhs temporaries
    try:
        cap = int(pltpu.get_tpu_info().vmem_capacity_bytes)
    except Exception:
        cap = 64 * 1024 * 1024                            # conservative (v7x)
    vmem_limit = int(min(max(est + (8 << 20), 32 << 20), (cap * 3) // 4))
    # TODO(synk): add halo-based row tiling of the grid for very large single
    # images (per-image footprint > VMEM budget) and for B=1 megacore split.

    kernel = functools.partial(
        _fused_patch_embed_kernel, patch_size=k, stride=s, w_out=w_out,
        m_img=m_img, eps=eps)

    tokens = pl.pallas_call(
        kernel,
        out_shape=jax.ShapeDtypeStruct((b, m_img, hidden), out_dt),
        grid_spec=pltpu.PrefetchScalarGridSpec(
            num_scalar_prefetch=0,
            grid=(b,),
            in_specs=[
                pl.BlockSpec((None, s, gh * w_out, kc), lambda i: (i, 0, 0, 0)),
                pl.BlockSpec((k, kc, hidden), lambda i: (0, 0, 0)),
                pl.BlockSpec((3, hidden), lambda i: (0, 0)),
            ],
            out_specs=pl.BlockSpec((None, m_img, hidden), lambda i: (i, 0, 0)),
        ),
        compiler_params=pltpu.CompilerParams(
            dimension_semantics=("parallel",),
            vmem_limit_bytes=vmem_limit),
    )(xw, w_k, bgb)
    return tokens


def segformer_overlap_patch_embeddings(x, weight, bias, gamma, beta, *,
                                       patch_size, stride, eps=1e-6,
                                       mxu_dtype=jnp.bfloat16):
    """Forward pass of SegformerOverlapPatchEmbeddings.

    x:      (B, C, H, W)       NCHW, like the PyTorch module
    weight: (hidden, C, K, K)  PyTorch Conv2d OIHW weight
    bias, gamma, beta: (hidden,)
    mxu_dtype: dtype fed to the MXU (default bf16 — accumulation and the
        LayerNorm stay in f32).  Pass jnp.float32 for strict f32 compute.
    Returns (tokens, h_out, w_out) with tokens of shape (B, h_out*w_out, hidden).
    """
    _, _, h, w = x.shape
    pad = patch_size // 2
    h_out = (h + 2 * pad - patch_size) // stride + 1
    w_out = (w + 2 * pad - patch_size) // stride + 1
    tokens = _forward(x, weight, bias, gamma, beta, patch_size=patch_size,
                      stride=stride, eps=eps, mxu_dtype=mxu_dtype)
    return tokens, h_out, w_out


def _reference(x, weight, bias, gamma, beta, *, patch_size, stride, eps=1e-6):
    """Pure-JAX reference (conv + layernorm) for verification."""
    padding = patch_size // 2
    y = lax.conv_general_dilated(
        x, weight, window_strides=(stride, stride),
        padding=[(padding, padding), (padding, padding)],
        dimension_numbers=("NCHW", "OIHW", "NCHW"))
    y = y + bias.reshape(1, -1, 1, 1)
    b, hdim, ho, wo = y.shape
    t = y.reshape(b, hdim, ho * wo).transpose(0, 2, 1)   # (B, HW, hidden)
    mean = jnp.mean(t, axis=-1, keepdims=True)
    var = jnp.mean((t - mean) ** 2, axis=-1, keepdims=True)
    tn = (t - mean) / jnp.sqrt(var + eps)
    return tn * gamma + beta, ho, wo


if __name__ == "__main__":
    # Small Segformer-stage-1-like config.
    B, C, H, W = 2, 4, 16, 16
    PATCH, STRIDE, HIDDEN = 7, 4, 32
    EPS = 1e-6

    key = jax.random.PRNGKey(0)
    k1, k2, k3, k4, k5 = jax.random.split(key, 5)
    x = jax.random.normal(k1, (B, C, H, W), dtype=jnp.float32)
    weight = jax.random.normal(k2, (HIDDEN, C, PATCH, PATCH), dtype=jnp.float32) * 0.05
    bias = jax.random.normal(k3, (HIDDEN,), dtype=jnp.float32) * 0.05
    gamma = 1.0 + 0.1 * jax.random.normal(k4, (HIDDEN,), dtype=jnp.float32)
    beta = 0.1 * jax.random.normal(k5, (HIDDEN,), dtype=jnp.float32)

    ref, ho_ref, wo_ref = _reference(x, weight, bias, gamma, beta,
                                     patch_size=PATCH, stride=STRIDE, eps=EPS)

    # f32 MXU path: strict numerical check against the XLA conv+LN reference.
    tok_f32, h_out, w_out = segformer_overlap_patch_embeddings(
        x, weight, bias, gamma, beta, patch_size=PATCH, stride=STRIDE, eps=EPS,
        mxu_dtype=jnp.float32)
    tok_f32 = jax.block_until_ready(tok_f32)
    assert tok_f32.shape == (B, h_out * w_out, HIDDEN)
    assert (h_out, w_out) == (int(ho_ref), int(wo_ref))
    np.testing.assert_allclose(np.asarray(tok_f32), np.asarray(ref),
                               rtol=1e-3, atol=1e-3)

    # Default bf16-MXU path (halves the kernel's input DMA bytes); f32
    # accumulation + f32 LayerNorm, so only a loose tolerance is needed.
    tok_bf16, _, _ = segformer_overlap_patch_embeddings(
        x, weight, bias, gamma, beta, patch_size=PATCH, stride=STRIDE, eps=EPS)
    tok_bf16 = jax.block_until_ready(tok_bf16)
    np.testing.assert_allclose(np.asarray(tok_bf16), np.asarray(ref),
                               rtol=3e-2, atol=3e-2)

    print("KERNEL_OK")
</pallas_src>

<mosaic_0001>
module attributes {stable_mosaic.version = 11 : i64} {
  func.func @_fused_patch_embed_kernel(%arg0: i32, %arg1: memref<1x4x20x28xf32, #tpu.memory_space<vmem>>, %arg2: memref<7x28x32xf32, #tpu.memory_space<vmem>>, %arg3: memref<3x32xf32, #tpu.memory_space<vmem>>, %arg4: memref<1x16x32xf32, #tpu.memory_space<vmem>>) attributes {dimension_semantics = [#tpu.dimension_semantics<parallel>], iteration_bounds = array<i64: 2>, scalar_prefetch = 0 : i64, scratch_operands = 0 : i64, tpu.core_type = #tpu.core_type<tc>, window_params = [{transform_indices = @transform_0, window_bounds = array<i64: 1, 4, 20, 28>}, {pipeline_mode = #tpu.pipeline_mode<synchronous>, transform_indices = @transform_1, window_bounds = array<i64: 7, 28, 32>}, {pipeline_mode = #tpu.pipeline_mode<synchronous>, transform_indices = @transform_2, window_bounds = array<i64: 3, 32>}, {transform_indices = @transform_3, window_bounds = array<i64: 1, 16, 32>}]} {
    %c0 = arith.constant 0 : index
    %c0_0 = arith.constant 0 : index
    %c0_1 = arith.constant 0 : index
    %c0_2 = arith.constant 0 : index
    %0 = vector.load %arg1[%c0, %c0_0, %c0_1, %c0_2] : memref<1x4x20x28xf32, #tpu.memory_space<vmem>>, vector<1x1x16x28xf32>
    %1 = vector.shape_cast %0 : vector<1x1x16x28xf32> to vector<16x28xf32>
    %c0_3 = arith.constant 0 : index
    %c0_4 = arith.constant 0 : index
    %c0_5 = arith.constant 0 : index
    %2 = vector.load %arg2[%c0_3, %c0_4, %c0_5] : memref<7x28x32xf32, #tpu.memory_space<vmem>>, vector<1x28x32xf32>
    %3 = vector.shape_cast %2 : vector<1x28x32xf32> to vector<28x32xf32>
    %cst = arith.constant dense<0.000000e+00> : vector<16x32xf32>
    %4 = tpu.matmul %1, %3, %cst {dimension_numbers = #tpu.dot_dimension_numbers<[1], [0], [0], [1], [0, 0, 1, 1], [], []>} : vector<16x28xf32>, vector<28x32xf32>, vector<16x32xf32> -> vector<16x32xf32>
    %c0_6 = arith.constant 0 : index
    %c1 = arith.constant 1 : index
    %c0_7 = arith.constant 0 : index
    %c0_8 = arith.constant 0 : index
    %5 = vector.load %arg1[%c0_6, %c1, %c0_7, %c0_8] : memref<1x4x20x28xf32, #tpu.memory_space<vmem>>, vector<1x1x16x28xf32>
    %6 = vector.shape_cast %5 : vector<1x1x16x28xf32> to vector<16x28xf32>
    %c1_9 = arith.constant 1 : index
    %c0_10 = arith.constant 0 : index
    %c0_11 = arith.constant 0 : index
    %7 = vector.load %arg2[%c1_9, %c0_10, %c0_11] : memref<7x28x32xf32, #tpu.memory_space<vmem>>, vector<1x28x32xf32>
    %8 = vector.shape_cast %7 : vector<1x28x32xf32> to vector<28x32xf32>
    %cst_12 = arith.constant dense<0.000000e+00> : vector<16x32xf32>
    %9 = tpu.matmul %6, %8, %cst_12 {dimension_numbers = #tpu.dot_dimension_numbers<[1], [0], [0], [1], [0, 0, 1, 1], [], []>} : vector<16x28xf32>, vector<28x32xf32>, vector<16x32xf32> -> vector<16x32xf32>
    %10 = arith.addf %4, %9 : vector<16x32xf32>
    %c0_13 = arith.constant 0 : index
    %c2 = arith.constant 2 : index
    %c0_14 = arith.constant 0 : index
    %c0_15 = arith.constant 0 : index
    %11 = vector.load %arg1[%c0_13, %c2, %c0_14, %c0_15] : memref<1x4x20x28xf32, #tpu.memory_space<vmem>>, vector<1x1x16x28xf32>
    %12 = vector.shape_cast %11 : vector<1x1x16x28xf32> to vector<16x28xf32>
    %c2_16 = arith.constant 2 : index
    %c0_17 = arith.constant 0 : index
    %c0_18 = arith.constant 0 : index
    %13 = vector.load %arg2[%c2_16, %c0_17, %c0_18] : memref<7x28x32xf32, #tpu.memory_space<vmem>>, vector<1x28x32xf32>
    %14 = vector.shape_cast %13 : vector<1x28x32xf32> to vector<28x32xf32>
    %cst_19 = arith.constant dense<0.000000e+00> : vector<16x32xf32>
    %15 = tpu.matmul %12, %14, %cst_19 {dimension_numbers = #tpu.dot_dimension_numbers<[1], [0], [0], [1], [0, 0, 1, 1], [], []>} : vector<16x28xf32>, vector<28x32xf32>, vector<16x32xf32> -> vector<16x32xf32>
    %16 = arith.addf %10, %15 : vector<16x32xf32>
    %c0_20 = arith.constant 0 : index
    %c3 = arith.constant 3 : index
    %c0_21 = arith.constant 0 : index
    %c0_22 = arith.constant 0 : index
    %17 = vector.load %arg1[%c0_20, %c3, %c0_21, %c0_22] : memref<1x4x20x28xf32, #tpu.memory_space<vmem>>, vector<1x1x16x28xf32>
    %18 = vector.shape_cast %17 : vector<1x1x16x28xf32> to vector<16x28xf32>
    %c3_23 = arith.constant 3 : index
    %c0_24 = arith.constant 0 : index
    %c0_25 = arith.constant 0 : index
    %19 = vector.load %arg2[%c3_23, %c0_24, %c0_25] : memref<7x28x32xf32, #tpu.memory_space<vmem>>, vector<1x28x32xf32>
    %20 = vector.shape_cast %19 : vector<1x28x32xf32> to vector<28x32xf32>
    %cst_26 = arith.constant dense<0.000000e+00> : vector<16x32xf32>
    %21 = tpu.matmul %18, %20, %cst_26 {dimension_numbers = #tpu.dot_dimension_numbers<[1], [0], [0], [1], [0, 0, 1, 1], [], []>} : vector<16x28xf32>, vector<28x32xf32>, vector<16x32xf32> -> vector<16x32xf32>
    %22 = arith.addf %16, %21 : vector<16x32xf32>
    %c0_27 = arith.constant 0 : index
    %c0_28 = arith.constant 0 : index
    %c4 = arith.constant 4 : index
    %c0_29 = arith.constant 0 : index
    %23 = vector.load %arg1[%c0_27, %c0_28, %c4, %c0_29] : memref<1x4x20x28xf32, #tpu.memory_space<vmem>>, vector<1x1x16x28xf32>
    %24 = vector.shape_cast %23 : vector<1x1x16x28xf32> to vector<16x28xf32>
    %c4_30 = arith.constant 4 : index
    %c0_31 = arith.constant 0 : index
    %c0_32 = arith.constant 0 : index
    %25 = vector.load %arg2[%c4_30, %c0_31, %c0_32] : memref<7x28x32xf32, #tpu.memory_space<vmem>>, vector<1x28x32xf32>
    %26 = vector.shape_cast %25 : vector<1x28x32xf32> to vector<28x32xf32>
    %cst_33 = arith.constant dense<0.000000e+00> : vector<16x32xf32>
    %27 = tpu.matmul %24, %26, %cst_33 {dimension_numbers = #tpu.dot_dimension_numbers<[1], [0], [0], [1], [0, 0, 1, 1], [], []>} : vector<16x28xf32>, vector<28x32xf32>, vector<16x32xf32> -> vector<16x32xf32>
    %28 = arith.addf %22, %27 : vector<16x32xf32>
    %c0_34 = arith.constant 0 : index
    %c1_35 = arith.constant 1 : index
    %c4_36 = arith.constant 4 : index
    %c0_37 = arith.constant 0 : index
    %29 = vector.load %arg1[%c0_34, %c1_35, %c4_36, %c0_37] : memref<1x4x20x28xf32, #tpu.memory_space<vmem>>, vector<1x1x16x28xf32>
    %30 = vector.shape_cast %29 : vector<1x1x16x28xf32> to vector<16x28xf32>
    %c5 = arith.constant 5 : index
    %c0_38 = arith.constant 0 : index
    %c0_39 = arith.constant 0 : index
    %31 = vector.load %arg2[%c5, %c0_38, %c0_39] : memref<7x28x32xf32, #tpu.memory_space<vmem>>, vector<1x28x32xf32>
    %32 = vector.shape_cast %31 : vector<1x28x32xf32> to vector<28x32xf32>
    %cst_40 = arith.constant dense<0.000000e+00> : vector<16x32xf32>
    %33 = tpu.matmul %30, %32, %cst_40 {dimension_numbers = #tpu.dot_dimension_numbers<[1], [0], [0], [1], [0, 0, 1, 1], [], []>} : vector<16x28xf32>, vector<28x32xf32>, vector<16x32xf32> -> vector<16x32xf32>
    %34 = arith.addf %28, %33 : vector<16x32xf32>
    %c0_41 = arith.constant 0 : index
    %c2_42 = arith.constant 2 : index
    %c4_43 = arith.constant 4 : index
    %c0_44 = arith.constant 0 : index
    %35 = vector.load %arg1[%c0_41, %c2_42, %c4_43, %c0_44] : memref<1x4x20x28xf32, #tpu.memory_space<vmem>>, vector<1x1x16x28xf32>
    %36 = vector.shape_cast %35 : vector<1x1x16x28xf32> to vector<16x28xf32>
    %c6 = arith.constant 6 : index
    %c0_45 = arith.constant 0 : index
    %c0_46 = arith.constant 0 : index
    %37 = vector.load %arg2[%c6, %c0_45, %c0_46] : memref<7x28x32xf32, #tpu.memory_space<vmem>>, vector<1x28x32xf32>
    %38 = vector.shape_cast %37 : vector<1x28x32xf32> to vector<28x32xf32>
    %cst_47 = arith.constant dense<0.000000e+00> : vector<16x32xf32>
    %39 = tpu.matmul %36, %38, %cst_47 {dimension_numbers = #tpu.dot_dimension_numbers<[1], [0], [0], [1], [0, 0, 1, 1], [], []>} : vector<16x28xf32>, vector<28x32xf32>, vector<16x32xf32> -> vector<16x32xf32>
    %40 = arith.addf %34, %39 : vector<16x32xf32>
    %c0_48 = arith.constant 0 : index
    %c0_49 = arith.constant 0 : index
    %41 = vector.load %arg3[%c0_48, %c0_49] : memref<3x32xf32, #tpu.memory_space<vmem>>, vector<1x32xf32>
    %42 = vector.broadcast %41 : vector<1x32xf32> to vector<16x32xf32>
    %43 = arith.addf %40, %42 : vector<16x32xf32>
    %cst_50 = arith.constant dense<0.000000e+00> : vector<16xf32>
    %44 = vector.multi_reduction <add>, %43, %cst_50 [1] : vector<16x32xf32> to vector<16xf32>
    %45 = vector.shape_cast %44 : vector<16xf32> to vector<16x1xf32>
    %cst_51 = arith.constant 3.125000e-02 : f32
    %46 = vector.broadcast %cst_51 : f32 to vector<16x1xf32>
    %47 = arith.mulf %45, %46 : vector<16x1xf32>
    %48 = arith.mulf %43, %43 : vector<16x32xf32>
    %cst_52 = arith.constant dense<0.000000e+00> : vector<16xf32>
    %49 = vector.multi_reduction <add>, %48, %cst_52 [1] : vector<16x32xf32> to vector<16xf32>
    %50 = vector.shape_cast %49 : vector<16xf32> to vector<16x1xf32>
    %cst_53 = arith.constant 3.125000e-02 : f32
    %51 = vector.broadcast %cst_53 : f32 to vector<16x1xf32>
    %52 = arith.mulf %50, %51 : vector<16x1xf32>
    %53 = arith.mulf %47, %47 : vector<16x1xf32>
    %54 = arith.subf %52, %53 : vector<16x1xf32>
    %55 = vector.broadcast %47 : vector<16x1xf32> to vector<16x32xf32>
    %56 = arith.subf %43, %55 : vector<16x32xf32>
    %cst_54 = arith.constant 9.99999997E-7 : f32
    %57 = vector.broadcast %cst_54 : f32 to vector<16x1xf32>
    %58 = arith.addf %54, %57 : vector<16x1xf32>
    %59 = math.rsqrt %58 : vector<16x1xf32>
    %60 = vector.broadcast %59 : vector<16x1xf32> to vector<16x32xf32>
    %61 = arith.mulf %56, %60 : vector<16x32xf32>
    %c1_55 = arith.constant 1 : index
    %c0_56 = arith.constant 0 : index
    %62 = vector.load %arg3[%c1_55, %c0_56] : memref<3x32xf32, #tpu.memory_space<vmem>>, vector<1x32xf32>
    %63 = vector.broadcast %62 : vector<1x32xf32> to vector<16x32xf32>
    %64 = arith.mulf %61, %63 : vector<16x32xf32>
    %c2_57 = arith.constant 2 : index
    %c0_58 = arith.constant 0 : index
    %65 = vector.load %arg3[%c2_57, %c0_58] : memref<3x32xf32, #tpu.memory_space<vmem>>, vector<1x32xf32>
    %66 = vector.broadcast %65 : vector<1x32xf32> to vector<16x32xf32>
    %67 = arith.addf %64, %66 : vector<16x32xf32>
    %c0_59 = arith.constant 0 : index
    %c0_60 = arith.constant 0 : index
    %c0_61 = arith.constant 0 : index
    %68 = vector.load %arg4[%c0_59, %c0_60, %c0_61] : memref<1x16x32xf32, #tpu.memory_space<vmem>>, vector<1x16x32xf32>
    %69 = vector.shape_cast %68 : vector<1x16x32xf32> to vector<16x32xf32>
    %70 = vector.shape_cast %67 : vector<16x32xf32> to vector<1x16x32xf32>
    tpu.vector_store %arg4[%c0_59, %c0_60, %c0_61], %70 {strides = array<i32>} : memref<1x16x32xf32, #tpu.memory_space<vmem>>, vector<1x16x32xf32>,
    return
  }
  func.func @transform_0(%arg0: i32) -> (i32, i32, i32, i32) {
    %c0_i32 = arith.constant 0 : i32
    %c0_i32_0 = arith.constant 0 : i32
    %c0_i32_1 = arith.constant 0 : i32
    %c0_i32_2 = arith.constant 0 : i32
    return %arg0, %c0_i32, %c0_i32_0, %c0_i32_1 : i32, i32, i32, i32
  }
  func.func @transform_1(%arg0: i32) -> (i32, i32, i32) {
    %c0_i32 = arith.constant 0 : i32
    %c0_i32_0 = arith.constant 0 : i32
    %c0_i32_1 = arith.constant 0 : i32
    %c0_i32_2 = arith.constant 0 : i32
    return %c0_i32, %c0_i32_0, %c0_i32_1 : i32, i32, i32
  }
  func.func @transform_2(%arg0: i32) -> (i32, i32) {
    %c0_i32 = arith.constant 0 : i32
    %c0_i32_0 = arith.constant 0 : i32
    %c0_i32_1 = arith.constant 0 : i32
    return %c0_i32, %c0_i32_0 : i32, i32
  }
  func.func @transform_3(%arg0: i32) -> (i32, i32, i32) {
    %c0_i32 = arith.constant 0 : i32
    %c0_i32_0 = arith.constant 0 : i32
    %c0_i32_1 = arith.constant 0 : i32
    return %arg0, %c0_i32, %c0_i32_0 : i32, i32, i32
  }
}

</mosaic_0001>

<llo_original>
// kernel: _forward.1
$region0: #{_forward.1}
  #allocation0 [shape = 'u32[]', space=smem, size = 0x4, offset = 0x4, fixed_abs, tag = 'smem constant byte address 0x4 - core index']
  #allocation1 [shape = 'u32[72,128]{1,0:T(1,128)}', space=vmem, size = 0x9000, scoped, tag = 'internal scratch']
  %s0 = inlined_call_operand.vmem [shape: f32[2,4,20,28], index: 0, kind: input, shape index: {}]
  %s1 = inlined_call_operand.vmem [shape: f32[7,28,32], index: 1, kind: input, shape index: {}]
  %s2 = inlined_call_operand.vmem [shape: f32[3,32], index: 2, kind: input, shape index: {}]
  %s3 = inlined_call_operand.hbm [shape: f32[2,16,32], index: 3, kind: output, shape index: {}]
  %s4 = sld [smem:[#allocation0]]
  $region45: #{_forward.1} parent=0
    _
  %s6 = ssub.s32 1, %s4
  %s7 = scalar_select 0, %s6, %s4
  $region1: #{_forward.1} parent=0
    #allocation2 [shape = 'u8[16384]{0}', space=vmem, size = 0x4000, scoped, tag = 'output window, operand 0']
    #allocation3 [shape = 's32[2]{0}', space=sflag, size = 0x8, scoped, tag = 'scoped memory for _forward.1']
    %8 = vsyncpa [#allocation3], 0
    %s9 = scalar_lea.sflag [#allocation3], 1
    %10 = vsyncpa %s9, 0
    loop: start=0, step=1, limit=4
    $region2: #{_forward.1} parent=1 // loop_pre_header
      _
    $region3: #{_forward.1} parent=1 // loop_header
      %s12 = sphi 0, %s16
      %p13 = scmp.ge.s32.totalorder %s12, 4
      %s22 = sphi 0, %s24
      %s25 = sphi 0, %s22
      %s26 = sphi 0, %s25
      %s42 = sphi 0, %s26
      %s46 = sphi 0, %s46
      %s48 = sphi 0, %s46
      %s49 = sphi 0, %s48
      %s63 = sphi 0, %s49
      %s67 = sphi 0, %s67
      %s69 = sphi 0, %s67
      %s70 = sphi 0, %s69
      %s84 = sphi 0, %s70
      %s90 = sphi 0, %s92
      %s93 = sphi 0, %s90
      %s94 = sphi 0, %s93
      %s110 = sphi 0, %s94
    $region4: #{_forward.1} parent=1 // loop_header_branch
      %15 = sbr.rel (%p13) target = $region8
    $region5: #{_forward.1} parent=1 // loop_body
      %s17 = ssub.s32 %s12, 1
      %s18 = ssub.s32 %s12, 2
      %s19 = sadd.s32 %s12, 1
      %s20 = ssub.s32 %s12, %s19
      %p21 = scmp.eq.s32.totalorder %s20, 0
      %s23 = sadd.s32 %s22, 1
      %s24 = scalar_select %p21, %s22, %s23
      %p27 = pneg %p21
      %p28 = scmp.eq.s32.totalorder %s12, 1
      %p29 = por %p27, %p28
      %p30 = scmp.ne.s32.totalorder %s22, %s25
      %p31 = scmp.eq.s32.totalorder %s12, 0
      %p32 = por %p30, %p31
      %p33 = scmp.ne.s32.totalorder %s22, %s25
      %p34 = scmp.eq.s32.totalorder %s17, 1
      %p35 = por %p33, %p34
      %p36 = scmp.ne.s32.totalorder %s25, %s26
      %p37 = scmp.eq.s32.totalorder %s17, 0
      %p38 = por %p36, %p37
      %p39 = scmp.ne.s32.totalorder %s25, %s26
      %p40 = scmp.eq.s32.totalorder %s18, 1
      %p41 = por %p39, %p40
      %p43 = scmp.ne.s32.totalorder %s26, %s42
      %p44 = scmp.eq.s32.totalorder %s18, 0
      %p45 = por %p43, %p44
      %s47 = sadd.s32 %s46, 1
      %p50 = scmp.eq.s32.totalorder %s12, 1
      %p51 = scmp.ne.s32.totalorder %s46, %s48
      %p52 = scmp.eq.s32.totalorder %s12, 0
      %p53 = por %p51, %p52
      %p54 = scmp.ne.s32.totalorder %s46, %s48
      %p55 = scmp.eq.s32.totalorder %s17, 1
      %p56 = por %p54, %p55
      %p57 = scmp.ne.s32.totalorder %s48, %s49
      %p58 = scmp.eq.s32.totalorder %s17, 0
      %p59 = por %p57, %p58
      %p60 = scmp.ne.s32.totalorder %s48, %s49
      %p61 = scmp.eq.s32.totalorder %s18, 1
      %p62 = por %p60, %p61
      %p64 = scmp.ne.s32.totalorder %s49, %s63
      %p65 = scmp.eq.s32.totalorder %s18, 0
      %p66 = por %p64, %p65
      %s68 = sadd.s32 %s67, 1
      %p71 = scmp.eq.s32.totalorder %s12, 1
      %p72 = scmp.ne.s32.totalorder %s67, %s69
      %p73 = scmp.eq.s32.totalorder %s12, 0
      %p74 = por %p72, %p73
      %p75 = scmp.ne.s32.totalorder %s67, %s69
      %p76 = scmp.eq.s32.totalorder %s17, 1
      %p77 = por %p75, %p76
      %p78 = scmp.ne.s32.totalorder %s69, %s70
      %p79 = scmp.eq.s32.totalorder %s17, 0
      %p80 = por %p78, %p79
      %p81 = scmp.ne.s32.totalorder %s69, %s70
      %p82 = scmp.eq.s32.totalorder %s18, 1
      %p83 = por %p81, %p82
      %p85 = scmp.ne.s32.totalorder %s70, %s84
      %p86 = scmp.eq.s32.totalorder %s18, 0
      %p87 = por %p85, %p86
      %s88 = ssub.s32 %s12, %s19
      %p89 = scmp.eq.s32.totalorder %s88, 0
      %s91 = sadd.s32 %s90, 1
      %s92 = scalar_select %p89, %s90, %s91
      %p95 = pneg %p89
      %p96 = scmp.eq.s32.totalorder %s12, 1
      %p97 = por %p95, %p96
      %p98 = scmp.ne.s32.totalorder %s90, %s93
      %p99 = scmp.eq.s32.totalorder %s12, 0
      %p100 = por %p98, %p99
      %p101 = scmp.ne.s32.totalorder %s90, %s93
      %p102 = scmp.eq.s32.totalorder %s17, 1
      %p103 = por %p101, %p102
      %p104 = scmp.ne.s32.totalorder %s93, %s94
      %p105 = scmp.eq.s32.totalorder %s17, 0
      %p106 = por %p104, %p105
      %p107 = scmp.ne.s32.totalorder %s93, %s94
      %p108 = scmp.eq.s32.totalorder %s18, 1
      %p109 = por %p107, %p108
      %p111 = scmp.ne.s32.totalorder %s94, %s110
      %p112 = scmp.eq.s32.totalorder %s18, 0
      %p113 = por %p111, %p112
      %p114 = scmp.le.s32.totalorder 1, %s12
      %p115 = scmp.lt.s32.totalorder %s12, 3
      %p116 = pnand %p114, %p115
      %p117 = pneg %p116
      // Predicated region
      $region9: #{_forward.1} parent=5 // pred_check
        _
      $region10: #{_forward.1} parent=5 // pred_check_branch
        %119 = sbr.rel (%p116) target = $region12
      $region11: #{_forward.1} parent=5 // pred_region
        %s120 = ssub.s32 %s12, 1
        // Predicated region
        $region13: #{_forward.1} parent=11 // pred_check
          %p121 = pneg %p59
        $region14: #{_forward.1} parent=11 // pred_check_branch
          %123 = sbr.rel (%p121) target = $region16
        $region15: #{_forward.1} parent=11 // pred_region
          _
        $region16: #{_forward.1} parent=11 // pred_fallthru
          _
        // Predicated region
        $region17: #{_forward.1} parent=11 // pred_check
          %p124 = pneg %p80
        $region18: #{_forward.1} parent=11 // pred_check_branch
          %126 = sbr.rel (%p124) target = $region20
        $region19: #{_forward.1} parent=11 // pred_region
          _
        $region20: #{_forward.1} parent=11 // pred_fallthru
          _
      $region12: #{_forward.1} parent=5 // pred_fallthru
        _
      %p127 = scmp.lt.s32.totalorder %s12, 2
      // Predicated region
      $region21: #{_forward.1} parent=5 // pred_check
        %p128 = pneg %p127
      $region22: #{_forward.1} parent=5 // pred_check_branch
        %130 = sbr.rel (%p128) target = $region24
      $region23: #{_forward.1} parent=5 // pred_region
        // Predicated region
        $region25: #{_forward.1} parent=23 // pred_check
          %p131 = pneg %p32
        $region26: #{_forward.1} parent=23 // pred_check_branch
          %133 = sbr.rel (%p131) target = $region28
        $region27: #{_forward.1} parent=23 // pred_region
          %p134 = scmp.lt.s32.totalorder %s12, 1
          %s135 = scalar_select %p134, %s12, 1
          %s136 = smul.addr %s135, 12
          %s137 = smul.addr %s136, 8
          %s138 = scalar_lea.vmem %s0, %s137
        $region28: #{_forward.1} parent=23 // pred_fallthru
          _
      $region24: #{_forward.1} parent=5 // pred_fallthru
        _
      %p139 = scmp.le.s32.totalorder 1, %s12
      %p140 = scmp.lt.s32.totalorder %s12, 3
      %p141 = pnand %p139, %p140
      %p142 = pneg %p141
      // Predicated region
      $region29: #{_forward.1} parent=5 // pred_check
        _
      $region30: #{_forward.1} parent=5 // pred_check_branch
        %144 = sbr.rel (%p141) target = $region32
      $region31: #{_forward.1} parent=5 // pred_region
        %s145 = ssub.s32 %s12, 1
        %p146 = scmp.lt.s32.totalorder %s17, 1
        %s147 = scalar_select %p146, %s17, 1
        %s148 = smul.addr %s147, 12
        %s149 = smul.addr %s148, 8
        %s150 = scalar_lea.vmem %s0, %s149
        %p151 = pneg %p38
        %p152 = pneg %p35
        %p153 = pneg %p59
        %p154 = pneg %p56
        %p155 = pneg %p80
        %p156 = pneg %p77
        %p157 = pneg %p106
        %p158 = pneg %p103
        %s159 = sand.u32 %s93, 1
        %s160 = scalar_lea.sflag [#allocation3], %s159
        %s161 = sand.u32 %s93, 1
        %s162 = smul.addr %s161, 16
        %s163 = scalar_lea.vmem [#allocation2], %s162
        %p164 = scmp.lt.s32.totalorder %s17, 1
        %s165 = scalar_select %p164, %s17, 1
        %s166 = smul.addr %s165, 12
        %s167 = smul.addr %s166, 8
        %s168 = scalar_lea.vmem %s0, %s167
        %v169 = vld [vmem:[%s168] sm:$0xff]
        %v170 = vld [vmem:[%s168 + $0x8] sm:$0xff]
        %v171 = vld [vmem:[%s1] sm:$0xff]
        %v172 = vld [vmem:[%s1 + $0x8] sm:$0xff]
        %v173 = vld [vmem:[%s1 + $0x10] sm:$0xff]
        %v174 = vld [vmem:[%s1 + $0x18] sm:$0xf]
        %s175 = scalar_lea.vmem %s168, 24
        %v176 = vld [vmem:[%s175] sm:$0xff]
        %v177 = vld [vmem:[%s175 + $0x8] sm:$0xff]
        %s178 = scalar_lea.vmem %s1, 32
        %v179 = vld [vmem:[%s178] sm:$0xff]
        %v180 = vld [vmem:[%s178 + $0x8] sm:$0xff]
        %v181 = vld [vmem:[%s178 + $0x10] sm:$0xff]
        %v182 = vld [vmem:[%s178 + $0x18] sm:$0xf]
        %vm183 = vcmask 228352
        %v185 = vsel %vm183, %v176, 0
        %v188 = vsel %vm183, %v177, 0
        %vm190 = vcmask 1043456
        %v192 = vsel %vm190, %v182, 0
        %194 = vmatpush.msra.mxu0 0.0
        %195 = vmatpush.msra.mxu0 0.0
        %196 = vmatpush.msra.mxu0 0.0
        %197 = vmatpush.msra.mxu0 0.0
        %198 = vmatpush.msra.mxu0 0.0
        %199 = vmatpush.msra.mxu0 0.0
        %200 = vmatpush.msra.mxu0 0.0
        %201 = vmatpush.msra.mxu0 0.0
        %202 = vmatpush.msra.mxu0 0.0
        %203 = vmatpush.msra.mxu0 0.0
        %204 = vmatpush.msra.mxu0 0.0
        %205 = vmatpush.msra.mxu0 0.0
        %206 = vmatpush.msra.mxu0 %v192
        %207 = vmatpush.msra.mxu0 %v181
        %208 = vmatpush.msra.mxu0 %v180
        %209 = vmatpush.msra.mxu0 %v179
        %210 = vmatmul.f32.gmra.mxu0 %v185
        %v211 = vpop.f32.mrf.mxu0
        %v212 = vadd.f32 0.0, %v211
        %213 = vmatmul.f32.gmra.mxu0 %v188
        %v214 = vpop.f32.mrf.mxu0
        %v215 = vadd.f32 0.0, %v214
        %216 = vdwg.mxu0
        %v218 = vsel %vm183, %v169, 0
        %v221 = vsel %vm183, %v170, 0
        %v224 = vsel %vm190, %v174, 0
        %226 = vmatpush.msra.mxu0 0.0
        %227 = vmatpush.msra.mxu0 0.0
        %228 = vmatpush.msra.mxu0 0.0
        %229 = vmatpush.msra.mxu0 0.0
        %230 = vmatpush.msra.mxu0 0.0
        %231 = vmatpush.msra.mxu0 0.0
        %232 = vmatpush.msra.mxu0 0.0
        %233 = vmatpush.msra.mxu0 0.0
        %234 = vmatpush.msra.mxu0 0.0
        %235 = vmatpush.msra.mxu0 0.0
        %236 = vmatpush.msra.mxu0 0.0
        %237 = vmatpush.msra.mxu0 0.0
        %238 = vmatpush.msra.mxu0 %v224
        %239 = vmatpush.msra.mxu0 %v173
        %240 = vmatpush.msra.mxu0 %v172
        %241 = vmatpush.msra.mxu0 %v171
        %242 = vmatmul.f32.gmra.mxu0 %v218
        %v243 = vpop.f32.mrf.mxu0
        %v244 = vadd.f32 %v212, %v243
        %245 = vmatmul.f32.gmra.mxu0 %v221
        %v246 = vpop.f32.mrf.mxu0
        %v247 = vadd.f32 %v215, %v246
        %248 = vdwg.mxu0
        %s249 = scalar_lea.vmem %s168, 48
        %v250 = vld [vmem:[%s249] sm:$0xff]
        %v251 = vld [vmem:[%s249 + $0x8] sm:$0xff]
        %s252 = scalar_lea.vmem %s1, 64
        %v253 = vld [vmem:[%s252] sm:$0xff]
        %v254 = vld [vmem:[%s252 + $0x8] sm:$0xff]
        %v255 = vld [vmem:[%s252 + $0x10] sm:$0xff]
        %v256 = vld [vmem:[%s252 + $0x18] sm:$0xf]
        %v258 = vsel %vm183, %v250, 0
        %v261 = vsel %vm183, %v251, 0
        %v264 = vsel %vm190, %v256, 0
        %266 = vmatpush.msra.mxu0 0.0
        %267 = vmatpush.msra.mxu0 0.0
        %268 = vmatpush.msra.mxu0 0.0
        %269 = vmatpush.msra.mxu0 0.0
        %270 = vmatpush.msra.mxu0 0.0
        %271 = vmatpush.msra.mxu0 0.0
        %272 = vmatpush.msra.mxu0 0.0
        %273 = vmatpush.msra.mxu0 0.0
        %274 = vmatpush.msra.mxu0 0.0
        %275 = vmatpush.msra.mxu0 0.0
        %276 = vmatpush.msra.mxu0 0.0
        %277 = vmatpush.msra.mxu0 0.0
        %278 = vmatpush.msra.mxu0 %v264
        %279 = vmatpush.msra.mxu0 %v255
        %280 = vmatpush.msra.mxu0 %v254
        %281 = vmatpush.msra.mxu0 %v253
        %282 = vmatmul.f32.gmra.mxu0 %v258
        %v283 = vpop.f32.mrf.mxu0
        %v284 = vadd.f32 0.0, %v283
        %285 = vmatmul.f32.gmra.mxu0 %v261
        %v286 = vpop.f32.mrf.mxu0
        %v287 = vadd.f32 0.0, %v286
        %288 = vdwg.mxu0
        %v289 = vadd.f32 %v244, %v284
        %v290 = vadd.f32 %v247, %v287
        %s291 = scalar_lea.vmem %s168, 72
        %v292 = vld [vmem:[%s291] sm:$0xff]
        %v293 = vld [vmem:[%s291 + $0x8] sm:$0xff]
        %s294 = scalar_lea.vmem %s1, 96
        %v295 = vld [vmem:[%s294] sm:$0xff]
        %v296 = vld [vmem:[%s294 + $0x8] sm:$0xff]
        %v297 = vld [vmem:[%s294 + $0x10] sm:$0xff]
        %v298 = vld [vmem:[%s294 + $0x18] sm:$0xf]
        %v300 = vsel %vm183, %v292, 0
        %v303 = vsel %vm183, %v293, 0
        %v306 = vsel %vm190, %v298, 0
        %308 = vmatpush.msra.mxu0 0.0
        %309 = vmatpush.msra.mxu0 0.0
        %310 = vmatpush.msra.mxu0 0.0
        %311 = vmatpush.msra.mxu0 0.0
        %312 = vmatpush.msra.mxu0 0.0
        %313 = vmatpush.msra.mxu0 0.0
        %314 = vmatpush.msra.mxu0 0.0
        %315 = vmatpush.msra.mxu0 0.0
        %316 = vmatpush.msra.mxu0 0.0
        %317 = vmatpush.msra.mxu0 0.0
        %318 = vmatpush.msra.mxu0 0.0
        %319 = vmatpush.msra.mxu0 0.0
        %320 = vmatpush.msra.mxu0 %v306
        %321 = vmatpush.msra.mxu0 %v297
        %322 = vmatpush.msra.mxu0 %v296
        %323 = vmatpush.msra.mxu0 %v295
        %324 = vmatmul.f32.gmra.mxu0 %v300
        %v325 = vpop.f32.mrf.mxu0
        %v326 = vadd.f32 0.0, %v325
        %327 = vmatmul.f32.gmra.mxu0 %v303
        %v328 = vpop.f32.mrf.mxu0
        %v329 = vadd.f32 0.0, %v328
        %330 = vdwg.mxu0
        %v331 = vadd.f32 %v289, %v326
        %v332 = vadd.f32 %v290, %v329
        %v333 = vld [vmem:[%s168 + $0x4] sm:$0xff]
        %v334 = vld [vmem:[%s168 + $0xc] sm:$0xff]
        %s335 = scalar_lea.vmem %s1, 128
        %v336 = vld [vmem:[%s335] sm:$0xff]
        %v337 = vld [vmem:[%s335 + $0x8] sm:$0xff]
        %v338 = vld [vmem:[%s335 + $0x10] sm:$0xff]
        %v339 = vld [vmem:[%s335 + $0x18] sm:$0xf]
        %v341 = vsel %vm183, %v333, 0
        %v344 = vsel %vm183, %v334, 0
        %v347 = vsel %vm190, %v339, 0
        %349 = vmatpush.msra.mxu0 0.0
        %350 = vmatpush.msra.mxu0 0.0
        %351 = vmatpush.msra.mxu0 0.0
        %352 = vmatpush.msra.mxu0 0.0
        %353 = vmatpush.msra.mxu0 0.0
        %354 = vmatpush.msra.mxu0 0.0
        %355 = vmatpush.msra.mxu0 0.0
        %356 = vmatpush.msra.mxu0 0.0
        %357 = vmatpush.msra.mxu0 0.0
        %358 = vmatpush.msra.mxu0 0.0
        %359 = vmatpush.msra.mxu0 0.0
        %360 = vmatpush.msra.mxu0 0.0
        %361 = vmatpush.msra.mxu0 %v347
        %362 = vmatpush.msra.mxu0 %v338
        %363 = vmatpush.msra.mxu0 %v337
        %364 = vmatpush.msra.mxu0 %v336
        %365 = vmatmul.f32.gmra.mxu0 %v341
        %v366 = vpop.f32.mrf.mxu0
        %v367 = vadd.f32 0.0, %v366
        %368 = vmatmul.f32.gmra.mxu0 %v344
        %v369 = vpop.f32.mrf.mxu0
        %v370 = vadd.f32 0.0, %v369
        %371 = vdwg.mxu0
        %v372 = vadd.f32 %v331, %v367
        %v373 = vadd.f32 %v332, %v370
        %v374 = vld [vmem:[%s175 + $0x4] sm:$0xff]
        %v375 = vld [vmem:[%s175 + $0xc] sm:$0xff]
        %s376 = scalar_lea.vmem %s1, 160
        %v377 = vld [vmem:[%s376] sm:$0xff]
        %v378 = vld [vmem:[%s376 + $0x8] sm:$0xff]
        %v379 = vld [vmem:[%s376 + $0x10] sm:$0xff]
        %v380 = vld [vmem:[%s376 + $0x18] sm:$0xf]
        %v382 = vsel %vm183, %v374, 0
        %v385 = vsel %vm183, %v375, 0
        %v388 = vsel %vm190, %v380, 0
        %390 = vmatpush.msra.mxu0 0.0
        %391 = vmatpush.msra.mxu0 0.0
        %392 = vmatpush.msra.mxu0 0.0
        %393 = vmatpush.msra.mxu0 0.0
        %394 = vmatpush.msra.mxu0 0.0
        %395 = vmatpush.msra.mxu0 0.0
        %396 = vmatpush.msra.mxu0 0.0
        %397 = vmatpush.msra.mxu0 0.0
        %398 = vmatpush.msra.mxu0 0.0
        %399 = vmatpush.msra.mxu0 0.0
        %400 = vmatpush.msra.mxu0 0.0
        %401 = vmatpush.msra.mxu0 0.0
        %402 = vmatpush.msra.mxu0 %v388
        %403 = vmatpush.msra.mxu0 %v379
        %404 = vmatpush.msra.mxu0 %v378
        %405 = vmatpush.msra.mxu0 %v377
        %406 = vmatmul.f32.gmra.mxu0 %v382
        %v407 = vpop.f32.mrf.mxu0
        %v408 = vadd.f32 0.0, %v407
        %409 = vmatmul.f32.gmra.mxu0 %v385
        %v410 = vpop.f32.mrf.mxu0
        %v411 = vadd.f32 0.0, %v410
        %412 = vdwg.mxu0
        %v413 = vadd.f32 %v372, %v408
        %v414 = vadd.f32 %v373, %v411
        %v415 = vld [vmem:[%s249 + $0x4] sm:$0xff]
        %v416 = vld [vmem:[%s249 + $0xc] sm:$0xff]
        %s417 = scalar_lea.vmem %s1, 192
        %v418 = vld [vmem:[%s417] sm:$0xff]
        %v419 = vld [vmem:[%s417 + $0x8] sm:$0xff]
        %v420 = vld [vmem:[%s417 + $0x10] sm:$0xff]
        %v421 = vld [vmem:[%s417 + $0x18] sm:$0xf]
        %v423 = vsel %vm183, %v415, 0
        %v426 = vsel %vm183, %v416, 0
        %v429 = vsel %vm190, %v421, 0
        %431 = vmatpush.msra.mxu0 0.0
        %432 = vmatpush.msra.mxu0 0.0
        %433 = vmatpush.msra.mxu0 0.0
        %434 = vmatpush.msra.mxu0 0.0
        %435 = vmatpush.msra.mxu0 0.0
        %436 = vmatpush.msra.mxu0 0.0
        %437 = vmatpush.msra.mxu0 0.0
        %438 = vmatpush.msra.mxu0 0.0
        %439 = vmatpush.msra.mxu0 0.0
        %440 = vmatpush.msra.mxu0 0.0
        %441 = vmatpush.msra.mxu0 0.0
        %442 = vmatpush.msra.mxu0 0.0
        %443 = vmatpush.msra.mxu0 %v429
        %444 = vmatpush.msra.mxu0 %v420
        %445 = vmatpush.msra.mxu0 %v419
        %446 = vmatpush.msra.mxu0 %v418
        %447 = vmatmul.f32.gmra.mxu0 %v423
        %v448 = vpop.f32.mrf.mxu0
        %v449 = vadd.f32 0.0, %v448
        %450 = vmatmul.f32.gmra.mxu0 %v426
        %v451 = vpop.f32.mrf.mxu0
        %v452 = vadd.f32 0.0, %v451
        %453 = vdwg.mxu0
        %v454 = vadd.f32 %v413, %v449
        %v455 = vadd.f32 %v414, %v452
        %v456 = vld [vmem:[%s2] sm:$0x1]
        %v457 = vperm.slane %v456, 0
        %v458 = vadd.f32 %v454, %v457
        %v459 = vadd.f32 %v455, %v457
        %vm460 = vcmask 261120
        %v461 = vsel %vm460, %v458, 0.0
        %462 = vadd.xlane.f32.xlu0 %v461
        %v463 = vpop.xlane.xlu0 %462
        %v464 = vsel %vm460, %v459, 0.0
        %465 = vadd.xlane.f32.xlu0 %v464
        %v466 = vpop.xlane.xlu0 %465
        %v467 = vmul.f32 %v463, 0.03125
        %v468 = vmul.f32 %v466, 0.03125
        %v469 = vmul.f32 %v458, %v458
        %v470 = vmul.f32 %v459, %v459
        %v471 = vsel %vm460, %v469, 0.0
        %472 = vadd.xlane.f32.xlu0 %v471
        %v473 = vpop.xlane.xlu0 %472
        %v474 = vsel %vm460, %v470, 0.0
        %475 = vadd.xlane.f32.xlu0 %v474
        %v476 = vpop.xlane.xlu0 %475
        %v477 = vmul.f32 %v473, 0.03125
        %v478 = vmul.f32 %v476, 0.03125
        %v479 = vmul.f32 %v467, %v467
        %v480 = vmul.f32 %v468, %v468
        %v481 = vsub.f32 %v477, %v479
        %v482 = vsub.f32 %v478, %v480
        %v483 = vsub.f32 %v458, %v467
        %v484 = vsub.f32 %v459, %v468
        %v485 = vadd.f32 %v481, 1e-06
        %v486 = vadd.f32 %v482, 1e-06
        %v487 = vrsqrt.pop %v485
        %v488 = vmul.f32 %v487, %v485
        %v489 = vmul.f32 %v488, %v487
        %v490 = vmul.f32 0.5, %v489
        %v491 = vsub.f32 1.5, %v490
        %v492 = vmul.f32 %v487, %v491
        %vm493 = vweird.f32 %v485
        %vm494 = vweird.f32 %v487
        %vm495 = vmor %vm493, %vm494
        %v496 = vsel %vm495, %v487, %v492
        %v497 = vrsqrt.pop %v486
        %v498 = vmul.f32 %v497, %v486
        %v499 = vmul.f32 %v498, %v497
        %v500 = vmul.f32 0.5, %v499
        %v501 = vsub.f32 1.5, %v500
        %v502 = vmul.f32 %v497, %v501
        %vm503 = vweird.f32 %v486
        %vm504 = vweird.f32 %v497
        %vm505 = vmor %vm503, %vm504
        %v506 = vsel %vm505, %v497, %v502
        %v507 = vmul.f32 %v483, %v496
        %v508 = vmul.f32 %v484, %v506
        %v509 = vld [vmem:[%s2 + $0x1] sm:$0x1]
        %v510 = vperm.slane %v509, 0
        %v511 = vmul.f32 %v507, %v510
        %v512 = vmul.f32 %v508, %v510
        %v513 = vld [vmem:[%s2 + $0x2] sm:$0x1]
        %v514 = vperm.slane %v513, 0
        %v515 = vadd.f32 %v511, %v514
        %v516 = vadd.f32 %v512, %v514
        %517 = vst.msk [vmem:[%s163] sm:$0xff] %vm460, %v515
        %518 = vst.msk [vmem:[%s163 + $0x8] sm:$0xff] %vm460, %v516
        %s519 = sand.u32 %s93, 1
        %s520 = scalar_lea.sflag [#allocation3], %s519
        %s521 = sand.u32 %s93, 1
        %s522 = smul.addr %s521, 16
        %s523 = scalar_lea.vmem [#allocation2], %s522
        // Predicated region
        $region33: #{_forward.1} parent=31 // pred_check
          %p524 = pneg %p103
        $region34: #{_forward.1} parent=31 // pred_check_branch
          %526 = sbr.rel (%p524) target = $region36
        $region35: #{_forward.1} parent=31 // pred_region
          %528 = vsyncadd %s520, 0
          %s529 = smul.addr %s17, 2
          %s530 = smul.addr %s529, 8
          %s531 = scalar_lea.hbm %s3, %s530
          %s532 = sshll.u32 %s523, 4
          %s533 = int_to_ptr.vmem [resolvable:$true] %s532
          %s534 = sshll.u32 %s531, 4
          %s535 = int_to_ptr.hbm [resolvable:$true] %s534
          %540 = dma.vmem_to_hbm [thread:$0]  %s533, 256, %s535, %s520, 128, 128, 8
        $region36: #{_forward.1} parent=31 // pred_fallthru
          _
      $region32: #{_forward.1} parent=5 // pred_fallthru
        _
      %p541 = scmp.le.s32.totalorder 2, %s12
      // Predicated region
      $region37: #{_forward.1} parent=5 // pred_check
        %p542 = pneg %p541
      $region38: #{_forward.1} parent=5 // pred_check_branch
        %544 = sbr.rel (%p542) target = $region40
      $region39: #{_forward.1} parent=5 // pred_region
        %s545 = ssub.s32 %s12, 2
        // Predicated region
        $region41: #{_forward.1} parent=39 // pred_check
          %p546 = pneg %p109
        $region42: #{_forward.1} parent=39 // pred_check_branch
          %548 = sbr.rel (%p546) target = $region44
        $region43: #{_forward.1} parent=39 // pred_region
          %s549 = sand.u32 %s94, 1
          %s550 = scalar_lea.sflag [#allocation3], %s549
          %s551 = sand.u32 %s94, 1
          %s552 = smul.addr %s551, 16
          %s553 = scalar_lea.vmem [#allocation2], %s552
          %555 = dma.done %s550, 256
        $region44: #{_forward.1} parent=39 // pred_fallthru
          _
      $region40: #{_forward.1} parent=5 // pred_fallthru
        _
    $region6: #{_forward.1} parent=1 // loop_footer
      %s16 = sadd.s32 1, %s12
    $region7: #{_forward.1} parent=1 // loop_footer_branch
      %11 = sbr.rel target = $region3
    $region8: #{_forward.1} parent=1 // loop_exit
      _
    %556 = vsyncpa [#allocation3], 1
    %s557 = scalar_lea.sflag [#allocation3], 1
    %558 = vsyncpa %s557, 1

</llo_original>
